<compile_context>
chip_gen: v7x
topology: tpu7x:2x2x1
jax: 0.10.0
libtpu: 0.0.40
codegen_flags: <defaults>
</compile_context>

<pallas_src>
import functools

import jax
import jax.numpy as jnp
from jax import lax
from jax.experimental import pallas as pl
from jax.experimental.pallas import tpu as pltpu


def _round_up(a, b):
    return (a + b - 1) // b * b


# ----------------------------------------------------------------------------
# Pallas kernel (flattened per-image rows):
#   out[n, f] = x[n, f] * (alpha[n, 0] if parity[f] else alpha[n, 1])
# ----------------------------------------------------------------------------
def _stripe_kernel(x_ref, par_ref, a_ref, o_ref):
    x = x_ref[...]                                   # (bn, tl), x.dtype
    par = par_ref[...]                               # (1, tl) f32, 1.0 on odd rows
    a = a_ref[...]                                   # (bn, 2) f32: [:,0]=odd, [:,1]=even
    # Per-element alpha: one vselect, then one multiply (compute in x.dtype).
    alpha = jnp.where(par > 0.5, a[:, 0:1], a[:, 1:2])   # (bn, tl) f32
    o_ref[...] = (x * alpha.astype(x.dtype)).astype(o_ref.dtype)


def horizontal_stripe_scale_pallas(x, alphas_odd, alphas_even):
    """Apply per-image odd/even-row scaling.

    x: (N, H, W); alphas_odd / alphas_even: (N,) float.
    """
    N, H, W = x.shape
    L = H * W
    itemsize = jnp.dtype(x.dtype).itemsize
    sub = max(8, 32 // itemsize)          # sublane multiple: 8 f32, 16 bf16, 32 int8

    # Lane-dense view of the images (contiguous -> free reshape) + tiny side inputs.
    x2 = x.reshape(N, L)
    par_row = (jnp.arange(H, dtype=jnp.int32) % 2).astype(jnp.float32)       # (H,)
    par = jnp.broadcast_to(par_row[:, None], (H, W)).reshape(1, L)           # (1, L)
    alphas = jnp.stack([alphas_odd.astype(jnp.float32),
                        alphas_even.astype(jnp.float32)], axis=1)            # (N, 2)

    # ---- Tiling from a PADDED per-block VMEM budget (~2 MiB per input block) ----
    budget = 2 * 1024 * 1024
    # Largest flat tile such that `sub` padded rows still fit the budget.
    tl_max = max(128, (budget // (sub * itemsize)) // 128 * 128)
    tl = L if L <= tl_max else tl_max                 # tl == L or a multiple of 128
    lane_bytes = _round_up(tl, 128) * itemsize
    bn = max(sub, (budget // lane_bytes) // sub * sub)  # multiple of `sub`
    bn = min(bn, N)                                     # bn < N stays a sub-multiple

    # Megacore: make sure there are >= 2 grid steps whenever the work is splittable
    # without violating the (8, 128) block rules.
    steps = pl.cdiv(N, bn) * pl.cdiv(L, tl)
    if steps < 2:
        if N >= 2 * sub:
            bn = _round_up(pl.cdiv(N, 2), sub)
        elif L >= 2 * 128 and tl == L:
            tl = _round_up(pl.cdiv(L, 2), 128)

    grid = (pl.cdiv(N, bn), pl.cdiv(L, tl))

    # ---- Padded-VMEM accounting -> explicit scoped-VMEM limit ----
    x_blk = _round_up(bn, sub) * _round_up(tl, 128) * itemsize
    par_blk = 8 * _round_up(tl, 128) * 4
    a_blk = _round_up(bn, 8) * 128 * 4
    need = 2 * (2 * x_blk + par_blk + a_blk)          # double-buffered in/out + sides
    vmem_limit = int(min(48 * 2**20, max(need + 8 * 2**20, 16 * 2**20)))

    y2 = pl.pallas_call(
        _stripe_kernel,
        out_shape=jax.ShapeDtypeStruct((N, L), x.dtype),
        grid=grid,
        in_specs=[
            pl.BlockSpec((bn, tl), lambda n, l: (n, l)),   # image rows
            pl.BlockSpec((1, tl), lambda n, l: (0, l)),    # parity row (reused over n)
            pl.BlockSpec((bn, 2), lambda n, l: (n, 0)),    # merged per-image alphas
        ],
        out_specs=pl.BlockSpec((bn, tl), lambda n, l: (n, l)),
        compiler_params=pltpu.CompilerParams(
            dimension_semantics=("parallel", "parallel"),
            vmem_limit_bytes=vmem_limit,
        ),
    )(x2, par, alphas)
    return y2.reshape(N, H, W)


# ----------------------------------------------------------------------------
# Pure-JAX reference (mirrors the PyTorch forward math) for correctness check.
# ----------------------------------------------------------------------------
def _stripe_scale_ref(x, alphas_odd, alphas_even):
    N, H, W = x.shape
    par = (jnp.arange(H) % 2).astype(jnp.float32)[None, :, None]          # (1,H,1)
    mask = (par * alphas_odd[:, None, None]
            + (1.0 - par) * alphas_even[:, None, None])                   # (N,H,1)
    return (x.astype(jnp.float32) * mask).astype(x.dtype)


# ----------------------------------------------------------------------------
# Horizontal_stripe_scale.forward equivalent.
# ----------------------------------------------------------------------------
def horizontal_stripe_scale_forward(x, key, *, alpha_min_max=(0.5, 1.0), prob=0.5):
    alpha_min, alpha_max = alpha_min_max
    alpha_range = alpha_max - alpha_min
    n_ims = x.shape[0]

    k_apply, k_odd, k_even = jax.random.split(key, 3)
    apply_stripes = jax.random.uniform(k_apply, ()) < prob            # torch.rand(1) < prob
    alphas_odd = (jax.random.uniform(k_odd, (n_ims,)) * alpha_range
                  + alpha_min).astype(jnp.float32)
    alphas_even = (jax.random.uniform(k_even, (n_ims,)) * alpha_range
                   + alpha_min).astype(jnp.float32)

    # lax.cond: the Pallas kernel only executes when the augmentation fires.
    return lax.cond(
        apply_stripes,
        lambda ops: horizontal_stripe_scale_pallas(*ops),
        lambda ops: ops[0],
        (x, alphas_odd, alphas_even),
    )


if __name__ == "__main__":
    key = jax.random.PRNGKey(0)
    k_data, k_alpha, k_fwd, k_data2 = jax.random.split(key, 4)
    kernel_jit = jax.jit(horizontal_stripe_scale_pallas)

    # 1) Module-default size (im_size=(36, 36)), small batch, layout (N, H, W).
    N, H, W = 2, 36, 36
    x = jax.random.uniform(k_data, (N, H, W), dtype=jnp.float32)
    k_ao, k_ae = jax.random.split(k_alpha)
    ao = (jax.random.uniform(k_ao, (N,)) * 0.5 + 0.5).astype(jnp.float32)
    ae = (jax.random.uniform(k_ae, (N,)) * 0.5 + 0.5).astype(jnp.float32)
    y = kernel_jit(x, ao, ae)
    jax.block_until_ready(y)
    y_ref = _stripe_scale_ref(x, ao, ae)
    assert y.shape == x.shape and y.dtype == x.dtype
    assert jnp.allclose(y, y_ref, rtol=1e-6, atol=1e-6), "kernel mismatch (2,36,36)"

    # 2) Batch > sublane count -> exercises bn < N (multiple-of-8 batch tiles).
    N2 = 16
    x2 = jax.random.uniform(k_data2, (N2, H, W), dtype=jnp.float32)
    k_ao2, k_ae2 = jax.random.split(k_ae)
    ao2 = (jax.random.uniform(k_ao2, (N2,)) * 0.5 + 0.5).astype(jnp.float32)
    ae2 = (jax.random.uniform(k_ae2, (N2,)) * 0.5 + 0.5).astype(jnp.float32)
    y2 = kernel_jit(x2, ao2, ae2)
    jax.block_until_ready(y2)
    y2_ref = _stripe_scale_ref(x2, ao2, ae2)
    assert jnp.allclose(y2, y2_ref, rtol=1e-6, atol=1e-6), "kernel mismatch (16,36,36)"

    # 3) Full module-equivalent forward (probability gate + sampled alphas).
    fwd = jax.jit(functools.partial(
        horizontal_stripe_scale_forward, alpha_min_max=(0.5, 1.0), prob=0.5))
    out = fwd(x, k_fwd)
    jax.block_until_ready(out)
    assert out.shape == x.shape and out.dtype == x.dtype

    print("KERNEL_OK")
</pallas_src>

<mosaic_0001>
module attributes {stable_mosaic.version = 11 : i64} {
  func.func @_stripe_kernel(%arg0: i32, %arg1: i32, %arg2: memref<2x768xf32, #tpu.memory_space<vmem>>, %arg3: memref<1x768xf32, #tpu.memory_space<vmem>>, %arg4: memref<2x2xf32, #tpu.memory_space<vmem>>, %arg5: memref<2x768xf32, #tpu.memory_space<vmem>>) attributes {dimension_semantics = [#tpu.dimension_semantics<parallel>, #tpu.dimension_semantics<parallel>], iteration_bounds = array<i64: 1, 2>, scalar_prefetch = 0 : i64, scratch_operands = 0 : i64, tpu.core_type = #tpu.core_type<tc>, window_params = [{transform_indices = @transform_0, window_bounds = array<i64: 2, 768>}, {transform_indices = @transform_1, window_bounds = array<i64: 1, 768>}, {transform_indices = @transform_2, window_bounds = array<i64: 2, 2>}, {transform_indices = @transform_3, window_bounds = array<i64: 2, 768>}]} {
    %c0 = arith.constant 0 : index
    %c0_0 = arith.constant 0 : index
    %0 = vector.load %arg2[%c0, %c0_0] : memref<2x768xf32, #tpu.memory_space<vmem>>, vector<2x768xf32>
    %c0_1 = arith.constant 0 : index
    %c0_2 = arith.constant 0 : index
    %1 = vector.load %arg3[%c0_1, %c0_2] : memref<1x768xf32, #tpu.memory_space<vmem>>, vector<1x768xf32>
    %c0_3 = arith.constant 0 : index
    %c0_4 = arith.constant 0 : index
    %2 = vector.load %arg4[%c0_3, %c0_4] : memref<2x2xf32, #tpu.memory_space<vmem>>, vector<2x2xf32>
    %cst = arith.constant 5.000000e-01 : f32
    %3 = vector.broadcast %cst : f32 to vector<1x768xf32>
    %4 = arith.cmpf ogt, %1, %3 : vector<1x768xf32>
    %5 = vector.extract_strided_slice %2 {offsets = [0, 0], sizes = [2, 1], strides = [1, 1]} : vector<2x2xf32> to vector<2x1xf32>
    %6 = vector.extract_strided_slice %2 {offsets = [0, 1], sizes = [2, 1], strides = [1, 1]} : vector<2x2xf32> to vector<2x1xf32>
    %7 = vector.shape_cast %4 : vector<1x768xi1> to vector<1x768xi1>
    %8 = vector.broadcast %7 : vector<1x768xi1> to vector<2x768xi1>
    %9 = vector.shape_cast %5 : vector<2x1xf32> to vector<2x1xf32>
    %10 = vector.broadcast %9 : vector<2x1xf32> to vector<2x768xf32>
    %11 = vector.shape_cast %6 : vector<2x1xf32> to vector<2x1xf32>
    %12 = vector.broadcast %11 : vector<2x1xf32> to vector<2x768xf32>
    %13 = arith.select %8, %10, %12 : vector<2x768xi1>, vector<2x768xf32>
    %14 = arith.mulf %0, %13 : vector<2x768xf32>
    %c0_5 = arith.constant 0 : index
    %c0_6 = arith.constant 0 : index
    %15 = vector.load %arg5[%c0_5, %c0_6] : memref<2x768xf32, #tpu.memory_space<vmem>>, vector<2x768xf32>
    tpu.vector_store %arg5[%c0_5, %c0_6], %14 {strides = array<i32>} : memref<2x768xf32, #tpu.memory_space<vmem>>, vector<2x768xf32>,
    return
  }
  func.func @transform_0(%arg0: i32, %arg1: i32) -> (i32, i32) {
    %c0_i32 = arith.constant 0 : i32
    return %arg0, %arg1 : i32, i32
  }
  func.func @transform_1(%arg0: i32, %arg1: i32) -> (i32, i32) {
    %c0_i32 = arith.constant 0 : i32
    %c0_i32_0 = arith.constant 0 : i32
    return %c0_i32, %arg1 : i32, i32
  }
  func.func @transform_2(%arg0: i32, %arg1: i32) -> (i32, i32) {
    %c0_i32 = arith.constant 0 : i32
    %c0_i32_0 = arith.constant 0 : i32
    return %arg0, %c0_i32 : i32, i32
  }
  func.func @transform_3(%arg0: i32, %arg1: i32) -> (i32, i32) {
    %c0_i32 = arith.constant 0 : i32
    return %arg0, %arg1 : i32, i32
  }
}

</mosaic_0001>

<llo_original>
// kernel: horizontal_stripe_scale_pallas.1
$region0: #{horizontal_stripe_scale_pallas.1}
  #allocation0 [shape = 'u32[]', space=smem, size = 0x4, offset = 0x4, fixed_abs, tag = 'smem constant byte address 0x4 - core index']
  #allocation1 [shape = 'u32[144,128]{1,0:T(1,128)}', space=vmem, size = 0x12000, scoped, tag = 'internal scratch']
  %s0 = inlined_call_operand.vmem [shape: f32[2,1296], index: 0, kind: input, shape index: {}]
  %s1 = inlined_call_operand.vmem [shape: f32[1,1296], index: 1, kind: input, shape index: {}]
  %s2 = inlined_call_operand.vmem [shape: f32[2,2], index: 2, kind: input, shape index: {}]
  %s3 = inlined_call_operand.vmem [shape: f32[2,1296], index: 3, kind: output, shape index: {}]
  %s4 = sld [smem:[#allocation0]]
  $region107: #{horizontal_stripe_scale_pallas.1} parent=0
    _
  %s6 = ssub.s32 1, %s4
  %s7 = scalar_select 0, %s6, %s4
  $region1: #{horizontal_stripe_scale_pallas.1} parent=0
    #allocation2 [shape = 'u8[12288]{0}', space=vmem, size = 0x3000, scoped, tag = 'output window, operand 0']
    loop: start=0, step=1, limit=4
    $region2: #{horizontal_stripe_scale_pallas.1} parent=1 // loop_pre_header
      _
    $region3: #{horizontal_stripe_scale_pallas.1} parent=1 // loop_header
      %s9 = sphi 0, %s13
      %p10 = scmp.ge.s32.totalorder %s9, 4
      %s16 = sphi 0, %s28
      %s17 = sphi 0, %s24
      %s18 = sphi 0, %s16
      %s19 = sphi 0, %s17
      %s20 = sphi 0, %s18
      %s21 = sphi 0, %s19
      %s33 = sphi 0, %s35
      %s36 = sphi 0, %s33
      %s37 = sphi 0, %s36
      %s53 = sphi 0, %s37
      %s59 = sphi 0, %s61
      %s62 = sphi 0, %s59
      %s63 = sphi 0, %s62
      %s79 = sphi 0, %s63
      %s85 = sphi 0, %s87
      %s88 = sphi 0, %s85
      %s89 = sphi 0, %s88
      %s105 = sphi 0, %s89
      %s113 = sphi 0, %s115
      %s116 = sphi 0, %s113
      %s117 = sphi 0, %s116
      %s133 = sphi 0, %s117
    $region4: #{horizontal_stripe_scale_pallas.1} parent=1 // loop_header_branch
      %12 = sbr.rel (%p10) target = $region8
    $region5: #{horizontal_stripe_scale_pallas.1} parent=1 // loop_body
      %s14 = ssub.s32 %s9, 1
      %s15 = ssub.s32 %s9, 2
      %s22 = sadd.s32 1, %s17
      %p23 = scmp.ge.s32.totalorder %s22, 2
      %s24 = scalar_select %p23, 0, %s22
      %s25 = sadd.s32 1, %s16
      %s26 = scalar_select %p23, %s25, %s16
      %p27 = scmp.ge.s32.totalorder %s26, 1
      %s28 = scalar_select %p27, 0, %s26
      %s29 = ssub.s32 %s16, %s28
      %s30 = ssub.s32 %s17, %s24
      %s31 = sor.u32 %s29, %s30
      %p32 = scmp.eq.s32.totalorder %s31, 0
      %s34 = sadd.s32 %s33, 1
      %s35 = scalar_select %p32, %s33, %s34
      %p38 = pneg %p32
      %p39 = scmp.eq.s32.totalorder %s9, 1
      %p40 = por %p38, %p39
      %p41 = scmp.ne.s32.totalorder %s33, %s36
      %p42 = scmp.eq.s32.totalorder %s9, 0
      %p43 = por %p41, %p42
      %p44 = scmp.ne.s32.totalorder %s33, %s36
      %p45 = scmp.eq.s32.totalorder %s14, 1
      %p46 = por %p44, %p45
      %p47 = scmp.ne.s32.totalorder %s36, %s37
      %p48 = scmp.eq.s32.totalorder %s14, 0
      %p49 = por %p47, %p48
      %p50 = scmp.ne.s32.totalorder %s36, %s37
      %p51 = scmp.eq.s32.totalorder %s15, 1
      %p52 = por %p50, %p51
      %p54 = scmp.ne.s32.totalorder %s37, %s53
      %p55 = scmp.eq.s32.totalorder %s15, 0
      %p56 = por %p54, %p55
      %s57 = ssub.s32 %s17, %s24
      %p58 = scmp.eq.s32.totalorder %s57, 0
      %s60 = sadd.s32 %s59, 1
      %s61 = scalar_select %p58, %s59, %s60
      %p64 = pneg %p58
      %p65 = scmp.eq.s32.totalorder %s9, 1
      %p66 = por %p64, %p65
      %p67 = scmp.ne.s32.totalorder %s59, %s62
      %p68 = scmp.eq.s32.totalorder %s9, 0
      %p69 = por %p67, %p68
      %p70 = scmp.ne.s32.totalorder %s59, %s62
      %p71 = scmp.eq.s32.totalorder %s14, 1
      %p72 = por %p70, %p71
      %p73 = scmp.ne.s32.totalorder %s62, %s63
      %p74 = scmp.eq.s32.totalorder %s14, 0
      %p75 = por %p73, %p74
      %p76 = scmp.ne.s32.totalorder %s62, %s63
      %p77 = scmp.eq.s32.totalorder %s15, 1
      %p78 = por %p76, %p77
      %p80 = scmp.ne.s32.totalorder %s63, %s79
      %p81 = scmp.eq.s32.totalorder %s15, 0
      %p82 = por %p80, %p81
      %s83 = ssub.s32 %s16, %s28
      %p84 = scmp.eq.s32.totalorder %s83, 0
      %s86 = sadd.s32 %s85, 1
      %s87 = scalar_select %p84, %s85, %s86
      %p90 = pneg %p84
      %p91 = scmp.eq.s32.totalorder %s9, 1
      %p92 = por %p90, %p91
      %p93 = scmp.ne.s32.totalorder %s85, %s88
      %p94 = scmp.eq.s32.totalorder %s9, 0
      %p95 = por %p93, %p94
      %p96 = scmp.ne.s32.totalorder %s85, %s88
      %p97 = scmp.eq.s32.totalorder %s14, 1
      %p98 = por %p96, %p97
      %p99 = scmp.ne.s32.totalorder %s88, %s89
      %p100 = scmp.eq.s32.totalorder %s14, 0
      %p101 = por %p99, %p100
      %p102 = scmp.ne.s32.totalorder %s88, %s89
      %p103 = scmp.eq.s32.totalorder %s15, 1
      %p104 = por %p102, %p103
      %p106 = scmp.ne.s32.totalorder %s89, %s105
      %p107 = scmp.eq.s32.totalorder %s15, 0
      %p108 = por %p106, %p107
      %s109 = ssub.s32 %s16, %s28
      %s110 = ssub.s32 %s17, %s24
      %s111 = sor.u32 %s109, %s110
      %p112 = scmp.eq.s32.totalorder %s111, 0
      %s114 = sadd.s32 %s113, 1
      %s115 = scalar_select %p112, %s113, %s114
      %p118 = pneg %p112
      %p119 = scmp.eq.s32.totalorder %s9, 1
      %p120 = por %p118, %p119
      %p121 = scmp.ne.s32.totalorder %s113, %s116
      %p122 = scmp.eq.s32.totalorder %s9, 0
      %p123 = por %p121, %p122
      %p124 = scmp.ne.s32.totalorder %s113, %s116
      %p125 = scmp.eq.s32.totalorder %s14, 1
      %p126 = por %p124, %p125
      %p127 = scmp.ne.s32.totalorder %s116, %s117
      %p128 = scmp.eq.s32.totalorder %s14, 0
      %p129 = por %p127, %p128
      %p130 = scmp.ne.s32.totalorder %s116, %s117
      %p131 = scmp.eq.s32.totalorder %s15, 1
      %p132 = por %p130, %p131
      %p134 = scmp.ne.s32.totalorder %s117, %s133
      %p135 = scmp.eq.s32.totalorder %s15, 0
      %p136 = por %p134, %p135
      %p137 = scmp.le.s32.totalorder 1, %s9
      %p138 = scmp.lt.s32.totalorder %s9, 3
      %p139 = pnand %p137, %p138
      %p140 = pneg %p139
      // Predicated region
      $region9: #{horizontal_stripe_scale_pallas.1} parent=5 // pred_check
        _
      $region10: #{horizontal_stripe_scale_pallas.1} parent=5 // pred_check_branch
        %142 = sbr.rel (%p139) target = $region12
      $region11: #{horizontal_stripe_scale_pallas.1} parent=5 // pred_region
        %s143 = ssub.s32 %s9, 1
        // Predicated region
        $region13: #{horizontal_stripe_scale_pallas.1} parent=11 // pred_check
          %p144 = pneg %p101
        $region14: #{horizontal_stripe_scale_pallas.1} parent=11 // pred_check_branch
          %146 = sbr.rel (%p144) target = $region16
        $region15: #{horizontal_stripe_scale_pallas.1} parent=11 // pred_region
          %p147 = scmp.lt.s32.totalorder %s18, 0
          %s148 = scalar_select %p147, %s18, 0
          %s149 = smul.addr %s148, 2
          %s150 = scalar_lea.vmem %s2, %s149
        $region16: #{horizontal_stripe_scale_pallas.1} parent=11 // pred_fallthru
          _
      $region12: #{horizontal_stripe_scale_pallas.1} parent=5 // pred_fallthru
        _
      %p151 = scmp.lt.s32.totalorder %s9, 2
      // Predicated region
      $region17: #{horizontal_stripe_scale_pallas.1} parent=5 // pred_check
        %p152 = pneg %p151
      $region18: #{horizontal_stripe_scale_pallas.1} parent=5 // pred_check_branch
        %154 = sbr.rel (%p152) target = $region20
      $region19: #{horizontal_stripe_scale_pallas.1} parent=5 // pred_region
        // Predicated region
        $region21: #{horizontal_stripe_scale_pallas.1} parent=19 // pred_check
          %p155 = pneg %p43
        $region22: #{horizontal_stripe_scale_pallas.1} parent=19 // pred_check_branch
          %157 = sbr.rel (%p155) target = $region24
        $region23: #{horizontal_stripe_scale_pallas.1} parent=19 // pred_region
          %s158 = smul.u32 6, %s17
          %s159 = ssub.s32 11, %s158
          %p160 = scmp.lt.s32.totalorder %s159, 6
          %s161 = scalar_select %p160, %s159, 6
          %s162 = smul.u32 32, %s161
          %p163 = scmp.lt.s32.totalorder %s16, 0
          %s164 = scalar_select %p163, %s16, 0
          %p165 = scmp.lt.s32.totalorder %s158, 10
          %s166 = scalar_select %p165, %s158, 10
          %s167 = smul.addr %s164, 11
          %s168 = sadd.s32 %s166, %s167
          %s169 = smul.addr %s168, 2
          %s170 = scalar_lea.vmem %s0, %s169
          %s171 = smul.u32 6, %s17
          %s172 = ssub.s32 11, %s171
          %p173 = scmp.lt.s32.totalorder %s172, 6
          %s174 = scalar_select %p173, %s172, 6
          %s175 = smul.u32 32, %s174
        $region24: #{horizontal_stripe_scale_pallas.1} parent=19 // pred_fallthru
          _
        // Predicated region
        $region25: #{horizontal_stripe_scale_pallas.1} parent=19 // pred_check
          %p176 = pneg %p69
        $region26: #{horizontal_stripe_scale_pallas.1} parent=19 // pred_check_branch
          %178 = sbr.rel (%p176) target = $region28
        $region27: #{horizontal_stripe_scale_pallas.1} parent=19 // pred_region
          %s179 = smul.u32 6, %s17
          %s180 = ssub.s32 11, %s179
          %p181 = scmp.lt.s32.totalorder %s180, 6
          %s182 = scalar_select %p181, %s180, 6
          %s183 = smul.u32 16, %s182
          %p184 = scmp.lt.s32.totalorder %s179, 10
          %s185 = scalar_select %p184, %s179, 10
          %s186 = scalar_lea.vmem %s1, %s185
          %s187 = smul.u32 6, %s17
          %s188 = ssub.s32 11, %s187
          %p189 = scmp.lt.s32.totalorder %s188, 6
          %s190 = scalar_select %p189, %s188, 6
          %s191 = smul.u32 16, %s190
        $region28: #{horizontal_stripe_scale_pallas.1} parent=19 // pred_fallthru
          _
      $region20: #{horizontal_stripe_scale_pallas.1} parent=5 // pred_fallthru
        _
      %p192 = scmp.le.s32.totalorder 1, %s9
      %p193 = scmp.lt.s32.totalorder %s9, 3
      %p194 = pnand %p192, %p193
      %p195 = pneg %p194
      // Predicated region
      $region29: #{horizontal_stripe_scale_pallas.1} parent=5 // pred_check
        _
      $region30: #{horizontal_stripe_scale_pallas.1} parent=5 // pred_check_branch
        %197 = sbr.rel (%p194) target = $region32
      $region31: #{horizontal_stripe_scale_pallas.1} parent=5 // pred_region
        %s198 = ssub.s32 %s9, 1
        %s199 = smul.u32 6, %s19
        %s200 = ssub.s32 11, %s199
        %p201 = scmp.lt.s32.totalorder %s200, 6
        %s202 = scalar_select %p201, %s200, 6
        %s203 = smul.u32 32, %s202
        %p204 = scmp.lt.s32.totalorder %s18, 0
        %s205 = scalar_select %p204, %s18, 0
        %p206 = scmp.lt.s32.totalorder %s199, 10
        %s207 = scalar_select %p206, %s199, 10
        %s208 = smul.addr %s205, 11
        %s209 = sadd.s32 %s207, %s208
        %s210 = smul.addr %s209, 2
        %s211 = scalar_lea.vmem %s0, %s210
        %p212 = pneg %p49
        %p213 = pneg %p46
        %s214 = smul.u32 6, %s19
        %s215 = ssub.s32 11, %s214
        %p216 = scmp.lt.s32.totalorder %s215, 6
        %s217 = scalar_select %p216, %s215, 6
        %s218 = smul.u32 16, %s217
        %p219 = scmp.lt.s32.totalorder %s214, 10
        %s220 = scalar_select %p219, %s214, 10
        %s221 = scalar_lea.vmem %s1, %s220
        %p222 = pneg %p75
        %p223 = pneg %p72
        %p224 = scmp.lt.s32.totalorder %s18, 0
        %s225 = scalar_select %p224, %s18, 0
        %s226 = smul.addr %s225, 2
        %s227 = scalar_lea.vmem %s2, %s226
        %p228 = pneg %p101
        %p229 = pneg %p98
        %p230 = pneg %p129
        %p231 = pneg %p126
        %s232 = sand.u32 %s116, 1
        %s233 = sand.u32 %s116, 1
        %s234 = smul.addr %s233, 12
        %s235 = scalar_lea.vmem [#allocation2], %s234
        %s236 = smul.u32 6, %s19
        %s237 = ssub.s32 11, %s236
        %p238 = scmp.lt.s32.totalorder %s237, 6
        %s239 = scalar_select %p238, %s237, 6
        %s240 = smul.u32 32, %s239
        %p241 = scmp.lt.s32.totalorder %s18, 0
        %s242 = scalar_select %p241, %s18, 0
        %p243 = scmp.lt.s32.totalorder %s236, 10
        %s244 = scalar_select %p243, %s236, 10
        %s245 = smul.addr %s242, 11
        %s246 = sadd.s32 %s244, %s245
        %s247 = smul.addr %s246, 2
        %s248 = scalar_lea.vmem %s0, %s247
        %s249 = smul.u32 6, %s19
        %s250 = ssub.s32 11, %s249
        %p251 = scmp.lt.s32.totalorder %s250, 6
        %s252 = scalar_select %p251, %s250, 6
        %s253 = smul.u32 32, %s252
        %s254 = smul.u32 6, %s19
        %s255 = ssub.s32 11, %s254
        %p256 = scmp.lt.s32.totalorder %s255, 6
        %s257 = scalar_select %p256, %s255, 6
        %s258 = smul.u32 16, %s257
        %p259 = scmp.lt.s32.totalorder %s254, 10
        %s260 = scalar_select %p259, %s254, 10
        %s261 = scalar_lea.vmem %s1, %s260
        %s262 = smul.u32 6, %s19
        %s263 = ssub.s32 11, %s262
        %p264 = scmp.lt.s32.totalorder %s263, 6
        %s265 = scalar_select %p264, %s263, 6
        %s266 = smul.u32 16, %s265
        %p267 = scmp.lt.s32.totalorder %s18, 0
        %s268 = scalar_select %p267, %s18, 0
        %s269 = smul.addr %s268, 2
        %s270 = scalar_lea.vmem %s2, %s269
        %s271 = smul.u32 6, %s19
        %s272 = ssub.s32 11, %s271
        %p273 = scmp.lt.s32.totalorder %s272, 6
        %s274 = scalar_select %p273, %s272, 6
        %s275 = smul.u32 32, %s274
        %v276 = vld [vmem:[%s248] sm:$0xff]
        %v277 = vld [vmem:[%s248 + $0x8] sm:$0xf]
        %v278 = vld [vmem:[%s261] sm:$0x3f]
        %v279 = vld [vmem:[%s270] sm:$0x3]
        %vm280 = vcmp.gt.f32.partialorder %v278, 0.5
        %v281 = vsel %vm280, 1, 0
        %v282 = vlaneseq
        %v283 = vshrl.u32 %v282, 7
        %v284 = vsub.s32 0, %v283
        %v285 = vrot.slane %v281, %v284
        %v286 = vlaneseq
        %v287 = vshrl.u32 %v286, 7
        %v288 = vsub.s32 1, %v287
        %v289 = vrot.slane %v281, %v288
        %v290 = vlaneseq
        %v291 = vshrl.u32 %v290, 7
        %v292 = vsub.s32 2, %v291
        %v293 = vrot.slane %v281, %v292
        %v294 = vlaneseq
        %v295 = vshrl.u32 %v294, 7
        %v296 = vsub.s32 3, %v295
        %v297 = vrot.slane %v281, %v296
        %v298 = vlaneseq
        %v299 = vshrl.u32 %v298, 7
        %v300 = vsub.s32 4, %v299
        %v301 = vrot.slane %v281, %v300
        %v302 = vlaneseq
        %v303 = vshrl.u32 %v302, 7
        %v304 = vsub.s32 5, %v303
        %v305 = vrot.slane %v281, %v304
        %vm306 = vcmp.eq.s32.totalorder %v285, 1
        %vm307 = vcmp.eq.s32.totalorder %v289, 1
        %vm308 = vcmp.eq.s32.totalorder %v293, 1
        %vm309 = vcmp.eq.s32.totalorder %v297, 1
        %vm310 = vcmp.eq.s32.totalorder %v301, 1
        %vm311 = vcmp.eq.s32.totalorder %v305, 1
        %313 = vset.pattern.permute.xlu0 0
        %314 = vperm.xlu0 %313, %v279
        %v315 = vpop.permute.xlu0 %314
        %317 = vset.pattern.permute.xlu0 1
        %318 = vperm.xlu0 %317, %v279
        %v319 = vpop.permute.xlu0 %318
        %v321 = vsel %vm306, %v315, %v319
        %v322 = vsel %vm307, %v315, %v319
        %v323 = vsel %vm308, %v315, %v319
        %v324 = vsel %vm309, %v315, %v319
        %v325 = vsel %vm310, %v315, %v319
        %v326 = vsel %vm311, %v315, %v319
        %v333 = vcombine.low %v321, %v322
        %v334 = vcombine.low %v323, %v324
        %v336 = vunpack.c.l.s4 1983009808
        %v337 = vunpack.c.0.s8 %v336
        %v338 = vlaneseq
        %v339 = vshrl.u32 %v338, 7
        %v340 = vsub.s32 %v337, %v339
        %v341 = vrot.slane %v333, %v340
        %v343 = vunpack.c.l.s4 1983009808
        %v344 = vunpack.c.0.s8 %v343
        %v345 = vlaneseq
        %v346 = vshrl.u32 %v345, 7
        %v347 = vsub.s32 %v344, %v346
        %v348 = vrot.slane %v334, %v347
        %v349 = vcombine.low %v341, %v348
        %v350 = vcombine.low %v325, %v326
        %v352 = vunpack.c.l.s4 1983009808
        %v353 = vunpack.c.0.s8 %v352
        %v354 = vlaneseq
        %v355 = vshrl.u32 %v354, 7
        %v356 = vsub.s32 %v353, %v355
        %v357 = vrot.slane %v350, %v356
        %v360 = vmul.f32 %v276, %v349
        %v361 = vmul.f32 %v277, %v357
        %362 = vst [vmem:[%s235] sm:$0xff] %v360
        %363 = vst [vmem:[%s235 + $0x8] sm:$0xf] %v361
        %s364 = sand.u32 %s116, 1
        %s365 = sand.u32 %s116, 1
        %s366 = smul.addr %s365, 12
        %s367 = scalar_lea.vmem [#allocation2], %s366
        // Predicated region
        $region33: #{horizontal_stripe_scale_pallas.1} parent=31 // pred_check
          %p368 = pneg %p126
        $region34: #{horizontal_stripe_scale_pallas.1} parent=31 // pred_check_branch
          %370 = sbr.rel (%p368) target = $region36
        $region35: #{horizontal_stripe_scale_pallas.1} parent=31 // pred_region
          %s371 = smul.u32 6, %s19
          %s372 = ssub.s32 11, %s371
          %p373 = scmp.lt.s32.totalorder %s372, 6
          %s374 = scalar_select %p373, %s372, 6
          %s375 = smul.u32 32, %s374
          %p376 = scmp.ne.s32.totalorder 0, %s375
          %s377 = smul.addr %s18, 11
          %s378 = sadd.s32 %s371, %s377
          %s379 = smul.addr %s378, 2
          %s380 = scalar_lea.vmem %s3, %s379
          %s381 = smul.u32 %s374, 2
          // Predicated region
          $region37: #{horizontal_stripe_scale_pallas.1} parent=35 // pred_check
            %p382 = pneg %p376
          $region38: #{horizontal_stripe_scale_pallas.1} parent=35 // pred_check_branch
            %384 = sbr.rel (%p382) target = $region40
          $region39: #{horizontal_stripe_scale_pallas.1} parent=35 // pred_region
            %p385 = scmp.lt.u32.totalorder %s381, 8
            %p386 = pneg %p385
            // Predicated region
            $region41: #{horizontal_stripe_scale_pallas.1} parent=39 // pred_check
              _
            $region42: #{horizontal_stripe_scale_pallas.1} parent=39 // pred_check_branch
              %388 = sbr.rel (%p385) target = $region44
            $region43: #{horizontal_stripe_scale_pallas.1} parent=39 // pred_region
              %s403 = sand.u32 %s381, 7
              %p404 = scmp.eq.s32.totalorder %s403, 0
              // Predicated region
              $region56: #{horizontal_stripe_scale_pallas.1} parent=43 // pred_check
                %p405 = pneg %p404
              $region57: #{horizontal_stripe_scale_pallas.1} parent=43 // pred_check_branch
                %407 = sbr.rel (%p405) target = $region59
              $region58: #{horizontal_stripe_scale_pallas.1} parent=43 // pred_region
                %s408 = sshrl.u32 %s381, 3
                %s409 = sshrl.u32 %s408, 6
                // While loop
                $region60: #{horizontal_stripe_scale_pallas.1} parent=58 // loop_pre_header
                  _
                $region61: #{horizontal_stripe_scale_pallas.1} parent=58 // loop_header
                  %s413 = sphi 0, %s415
                  %p414 = scmp.ge.s32.totalorder %s413, %s409
                  %s418 = sphi 0, %s551
                  %s419 = sphi %s367, %s554
                  %s420 = sphi %s380, %s555
                $region62: #{horizontal_stripe_scale_pallas.1} parent=58 // loop_header_branch
                  %417 = sbr.rel (%p414) target = $region66
                $region63: #{horizontal_stripe_scale_pallas.1} parent=58 // loop_body
                  %v421 = vld [vmem:[%s419] sm:$0xff]
                  %422 = vst [vmem:[%s420] sm:$0xff] %v421
                  %v423 = vld [vmem:[%s419 + $0x8] sm:$0xff]
                  %424 = vst [vmem:[%s420 + $0x8] sm:$0xff] %v423
                  %v425 = vld [vmem:[%s419 + $0x10] sm:$0xff]
                  %426 = vst [vmem:[%s420 + $0x10] sm:$0xff] %v425
                  %v427 = vld [vmem:[%s419 + $0x18] sm:$0xff]
                  %428 = vst [vmem:[%s420 + $0x18] sm:$0xff] %v427
                  %v429 = vld [vmem:[%s419 + $0x20] sm:$0xff]
                  %430 = vst [vmem:[%s420 + $0x20] sm:$0xff] %v429
                  %v431 = vld [vmem:[%s419 + $0x28] sm:$0xff]
                  %432 = vst [vmem:[%s420 + $0x28] sm:$0xff] %v431
                  %v433 = vld [vmem:[%s419 + $0x30] sm:$0xff]
                  %434 = vst [vmem:[%s420 + $0x30] sm:$0xff] %v433
                  %v435 = vld [vmem:[%s419 + $0x38] sm:$0xff]
                  %436 = vst [vmem:[%s420 + $0x38] sm:$0xff] %v435
                  %v437 = vld [vmem:[%s419 + $0x40] sm:$0xff]
                  %438 = vst [vmem:[%s420 + $0x40] sm:$0xff] %v437
                  %v439 = vld [vmem:[%s419 + $0x48] sm:$0xff]
                  %440 = vst [vmem:[%s420 + $0x48] sm:$0xff] %v439
                  %v441 = vld [vmem:[%s419 + $0x50] sm:$0xff]
                  %442 = vst [vmem:[%s420 + $0x50] sm:$0xff] %v441
                  %v443 = vld [vmem:[%s419 + $0x58] sm:$0xff]
                  %444 = vst [vmem:[%s420 + $0x58] sm:$0xff] %v443
                  %v445 = vld [vmem:[%s419 + $0x60] sm:$0xff]
                  %446 = vst [vmem:[%s420 + $0x60] sm:$0xff] %v445
                  %v447 = vld [vmem:[%s419 + $0x68] sm:$0xff]
                  %448 = vst [vmem:[%s420 + $0x68] sm:$0xff] %v447
                  %v449 = vld [vmem:[%s419 + $0x70] sm:$0xff]
                  %450 = vst [vmem:[%s420 + $0x70] sm:$0xff] %v449
                  %v451 = vld [vmem:[%s419 + $0x78] sm:$0xff]
                  %452 = vst [vmem:[%s420 + $0x78] sm:$0xff] %v451
                  %v453 = vld [vmem:[%s419 + $0x80] sm:$0xff]
                  %454 = vst [vmem:[%s420 + $0x80] sm:$0xff] %v453
                  %v455 = vld [vmem:[%s419 + $0x88] sm:$0xff]
                  %456 = vst [vmem:[%s420 + $0x88] sm:$0xff] %v455
                  %v457 = vld [vmem:[%s419 + $0x90] sm:$0xff]
                  %458 = vst [vmem:[%s420 + $0x90] sm:$0xff] %v457
                  %v459 = vld [vmem:[%s419 + $0x98] sm:$0xff]
                  %460 = vst [vmem:[%s420 + $0x98] sm:$0xff] %v459
                  %v461 = vld [vmem:[%s419 + $0xa0] sm:$0xff]
                  %462 = vst [vmem:[%s420 + $0xa0] sm:$0xff] %v461
                  %v463 = vld [vmem:[%s419 + $0xa8] sm:$0xff]
                  %464 = vst [vmem:[%s420 + $0xa8] sm:$0xff] %v463
                  %v465 = vld [vmem:[%s419 + $0xb0] sm:$0xff]
                  %466 = vst [vmem:[%s420 + $0xb0] sm:$0xff] %v465
                  %v467 = vld [vmem:[%s419 + $0xb8] sm:$0xff]
                  %468 = vst [vmem:[%s420 + $0xb8] sm:$0xff] %v467
                  %v469 = vld [vmem:[%s419 + $0xc0] sm:$0xff]
                  %470 = vst [vmem:[%s420 + $0xc0] sm:$0xff] %v469
                  %v471 = vld [vmem:[%s419 + $0xc8] sm:$0xff]
                  %472 = vst [vmem:[%s420 + $0xc8] sm:$0xff] %v471
                  %v473 = vld [vmem:[%s419 + $0xd0] sm:$0xff]
                  %474 = vst [vmem:[%s420 + $0xd0] sm:$0xff] %v473
                  %v475 = vld [vmem:[%s419 + $0xd8] sm:$0xff]
                  %476 = vst [vmem:[%s420 + $0xd8] sm:$0xff] %v475
                  %v477 = vld [vmem:[%s419 + $0xe0] sm:$0xff]
                  %478 = vst [vmem:[%s420 + $0xe0] sm:$0xff] %v477
                  %v479 = vld [vmem:[%s419 + $0xe8] sm:$0xff]
                  %480 = vst [vmem:[%s420 + $0xe8] sm:$0xff] %v479
                  %v481 = vld [vmem:[%s419 + $0xf0] sm:$0xff]
                  %482 = vst [vmem:[%s420 + $0xf0] sm:$0xff] %v481
                  %v483 = vld [vmem:[%s419 + $0xf8] sm:$0xff]
                  %484 = vst [vmem:[%s420 + $0xf8] sm:$0xff] %v483
                  %v485 = vld [vmem:[%s419 + $0x100] sm:$0xff]
                  %486 = vst [vmem:[%s420 + $0x100] sm:$0xff] %v485
                  %v487 = vld [vmem:[%s419 + $0x108] sm:$0xff]
                  %488 = vst [vmem:[%s420 + $0x108] sm:$0xff] %v487
                  %v489 = vld [vmem:[%s419 + $0x110] sm:$0xff]
                  %490 = vst [vmem:[%s420 + $0x110] sm:$0xff] %v489
                  %v491 = vld [vmem:[%s419 + $0x118] sm:$0xff]
                  %492 = vst [vmem:[%s420 + $0x118] sm:$0xff] %v491
                  %v493 = vld [vmem:[%s419 + $0x120] sm:$0xff]
                  %494 = vst [vmem:[%s420 + $0x120] sm:$0xff] %v493
                  %v495 = vld [vmem:[%s419 + $0x128] sm:$0xff]
                  %496 = vst [vmem:[%s420 + $0x128] sm:$0xff] %v495
                  %v497 = vld [vmem:[%s419 + $0x130] sm:$0xff]
                  %498 = vst [vmem:[%s420 + $0x130] sm:$0xff] %v497
                  %v499 = vld [vmem:[%s419 + $0x138] sm:$0xff]
                  %500 = vst [vmem:[%s420 + $0x138] sm:$0xff] %v499
                  %v501 = vld [vmem:[%s419 + $0x140] sm:$0xff]
                  %502 = vst [vmem:[%s420 + $0x140] sm:$0xff] %v501
                  %v503 = vld [vmem:[%s419 + $0x148] sm:$0xff]
                  %504 = vst [vmem:[%s420 + $0x148] sm:$0xff] %v503
                  %v505 = vld [vmem:[%s419 + $0x150] sm:$0xff]
                  %506 = vst [vmem:[%s420 + $0x150] sm:$0xff] %v505
                  %v507 = vld [vmem:[%s419 + $0x158] sm:$0xff]
                  %508 = vst [vmem:[%s420 + $0x158] sm:$0xff] %v507
                  %v509 = vld [vmem:[%s419 + $0x160] sm:$0xff]
                  %510 = vst [vmem:[%s420 + $0x160] sm:$0xff] %v509
                  %v511 = vld [vmem:[%s419 + $0x168] sm:$0xff]
                  %512 = vst [vmem:[%s420 + $0x168] sm:$0xff] %v511
                  %v513 = vld [vmem:[%s419 + $0x170] sm:$0xff]
                  %514 = vst [vmem:[%s420 + $0x170] sm:$0xff] %v513
                  %v515 = vld [vmem:[%s419 + $0x178] sm:$0xff]
                  %516 = vst [vmem:[%s420 + $0x178] sm:$0xff] %v515
                  %v517 = vld [vmem:[%s419 + $0x180] sm:$0xff]
                  %518 = vst [vmem:[%s420 + $0x180] sm:$0xff] %v517
                  %v519 = vld [vmem:[%s419 + $0x188] sm:$0xff]
                  %520 = vst [vmem:[%s420 + $0x188] sm:$0xff] %v519
                  %v521 = vld [vmem:[%s419 + $0x190] sm:$0xff]
                  %522 = vst [vmem:[%s420 + $0x190] sm:$0xff] %v521
                  %v523 = vld [vmem:[%s419 + $0x198] sm:$0xff]
                  %524 = vst [vmem:[%s420 + $0x198] sm:$0xff] %v523
                  %v525 = vld [vmem:[%s419 + $0x1a0] sm:$0xff]
                  %526 = vst [vmem:[%s420 + $0x1a0] sm:$0xff] %v525
                  %v527 = vld [vmem:[%s419 + $0x1a8] sm:$0xff]
                  %528 = vst [vmem:[%s420 + $0x1a8] sm:$0xff] %v527
                  %v529 = vld [vmem:[%s419 + $0x1b0] sm:$0xff]
                  %530 = vst [vmem:[%s420 + $0x1b0] sm:$0xff] %v529
                  %v531 = vld [vmem:[%s419 + $0x1b8] sm:$0xff]
                  %532 = vst [vmem:[%s420 + $0x1b8] sm:$0xff] %v531
                  %v533 = vld [vmem:[%s419 + $0x1c0] sm:$0xff]
                  %534 = vst [vmem:[%s420 + $0x1c0] sm:$0xff] %v533
                  %v535 = vld [vmem:[%s419 + $0x1c8] sm:$0xff]
                  %536 = vst [vmem:[%s420 + $0x1c8] sm:$0xff] %v535
                  %v537 = vld [vmem:[%s419 + $0x1d0] sm:$0xff]
                  %538 = vst [vmem:[%s420 + $0x1d0] sm:$0xff] %v537
                  %v539 = vld [vmem:[%s419 + $0x1d8] sm:$0xff]
                  %540 = vst [vmem:[%s420 + $0x1d8] sm:$0xff] %v539
                  %v541 = vld [vmem:[%s419 + $0x1e0] sm:$0xff]
                  %542 = vst [vmem:[%s420 + $0x1e0] sm:$0xff] %v541
                  %v543 = vld [vmem:[%s419 + $0x1e8] sm:$0xff]
                  %544 = vst [vmem:[%s420 + $0x1e8] sm:$0xff] %v543
                  %v545 = vld [vmem:[%s419 + $0x1f0] sm:$0xff]
                  %546 = vst [vmem:[%s420 + $0x1f0] sm:$0xff] %v545
                  %v547 = vld [vmem:[%s419 + $0x1f8] sm:$0xff]
                  %548 = vst [vmem:[%s420 + $0x1f8] sm:$0xff] %v547
                  %s549 = sadd.s32 1, %s418
                  %p550 = scmp.ge.s32.totalorder %s549, %s409
                  %s551 = scalar_select %p550, 0, %s549
                  %s552 = smul.u32 %s551, 512
                  %s553 = smul.u32 %s551, 512
                  %s554 = scalar_lea.vmem %s367, %s552 [#allocation2]
                  %s555 = scalar_lea.vmem %s380, %s553
                $region64: #{horizontal_stripe_scale_pallas.1} parent=58 // loop_footer
                  %s415 = sadd.s32 %s413, 1
                $region65: #{horizontal_stripe_scale_pallas.1} parent=58 // loop_footer_branch
                  %412 = sbr.rel target = $region61
                $region66: #{horizontal_stripe_scale_pallas.1} parent=58 // loop_exit
                  _
                %s556 = sshrl.u32 %s408, 6
                %s557 = sand.u32 %s408, 63
                %s558 = smul.u32 %s556, 64
                %s559 = smul.u32 128, %s558
                %s560 = sshra.s32 %s559, 4
                %s561 = scalar_lea.vmem %s367, %s560 [#allocation2]
                %s562 = smul.u32 128, %s558
                %s563 = sshra.s32 %s562, 4
                %s564 = scalar_lea.vmem %s380, %s563
                // While loop
                $region67: #{horizontal_stripe_scale_pallas.1} parent=58 // loop_pre_header
                  _
                $region68: #{horizontal_stripe_scale_pallas.1} parent=58 // loop_header
                  %s568 = sphi 0, %s570
                  %p569 = scmp.ge.s32.totalorder %s568, %s557
                  %s573 = sphi 0, %s580
                  %s574 = sphi %s561, %s583
                  %s575 = sphi %s564, %s584
                $region69: #{horizontal_stripe_scale_pallas.1} parent=58 // loop_header_branch
                  %572 = sbr.rel (%p569) target = $region73
                $region70: #{horizontal_stripe_scale_pallas.1} parent=58 // loop_body
                  %v576 = vld [vmem:[%s574] sm:$0xff]
                  %577 = vst [vmem:[%s575] sm:$0xff] %v576
                  %s578 = sadd.s32 1, %s573
                  %p579 = scmp.ge.s32.totalorder %s578, %s557
                  %s580 = scalar_select %p579, 0, %s578
                  %s581 = smul.u32 %s580, 8
                  %s582 = smul.u32 %s580, 8
                  %s583 = scalar_lea.vmem %s561, %s581 [#allocation2]
                  %s584 = scalar_lea.vmem %s564, %s582
                $region71: #{horizontal_stripe_scale_pallas.1} parent=58 // loop_footer
                  %s570 = sadd.s32 %s568, 1
                $region72: #{horizontal_stripe_scale_pallas.1} parent=58 // loop_footer_branch
                  %567 = sbr.rel target = $region68
                $region73: #{horizontal_stripe_scale_pallas.1} parent=58 // loop_exit
                  _
              $region59: #{horizontal_stripe_scale_pallas.1} parent=43 // pred_fallthru
                _
              %p585 = pneg %p404
              // Predicated region
              $region74: #{horizontal_stripe_scale_pallas.1} parent=43 // pred_check
                _
              $region75: #{horizontal_stripe_scale_pallas.1} parent=43 // pred_check_branch
                %587 = sbr.rel (%p404) target = $region77
              $region76: #{horizontal_stripe_scale_pallas.1} parent=43 // pred_region
                %s588 = sand.u32 %s381, 7
                %s589 = ssub.s32 %s381, %s588
                %s590 = scalar_lea.vmem %s367, %s589 [#allocation2]
                %s591 = ssub.s32 %s381, %s588
                %s592 = scalar_lea.vmem %s380, %s591
                %s593 = sshrl.u32 %s381, 3
                %s594 = sshrl.u32 %s593, 6
                // While loop
                $region78: #{horizontal_stripe_scale_pallas.1} parent=76 // loop_pre_header
                  _
                $region79: #{horizontal_stripe_scale_pallas.1} parent=76 // loop_header
                  %s598 = sphi 0, %s600
                  %p599 = scmp.ge.s32.totalorder %s598, %s594
                  %s603 = sphi 0, %s736
                  %s604 = sphi %s367, %s739
                  %s605 = sphi %s380, %s740
                $region80: #{horizontal_stripe_scale_pallas.1} parent=76 // loop_header_branch
                  %602 = sbr.rel (%p599) target = $region84
                $region81: #{horizontal_stripe_scale_pallas.1} parent=76 // loop_body
                  %v606 = vld [vmem:[%s604] sm:$0xff]
                  %607 = vst [vmem:[%s605] sm:$0xff] %v606
                  %v608 = vld [vmem:[%s604 + $0x8] sm:$0xff]
                  %609 = vst [vmem:[%s605 + $0x8] sm:$0xff] %v608
                  %v610 = vld [vmem:[%s604 + $0x10] sm:$0xff]
                  %611 = vst [vmem:[%s605 + $0x10] sm:$0xff] %v610
                  %v612 = vld [vmem:[%s604 + $0x18] sm:$0xff]
                  %613 = vst [vmem:[%s605 + $0x18] sm:$0xff] %v612
                  %v614 = vld [vmem:[%s604 + $0x20] sm:$0xff]
                  %615 = vst [vmem:[%s605 + $0x20] sm:$0xff] %v614
                  %v616 = vld [vmem:[%s604 + $0x28] sm:$0xff]
                  %617 = vst [vmem:[%s605 + $0x28] sm:$0xff] %v616
                  %v618 = vld [vmem:[%s604 + $0x30] sm:$0xff]
                  %619 = vst [vmem:[%s605 + $0x30] sm:$0xff] %v618
                  %v620 = vld [vmem:[%s604 + $0x38] sm:$0xff]
                  %621 = vst [vmem:[%s605 + $0x38] sm:$0xff] %v620
                  %v622 = vld [vmem:[%s604 + $0x40] sm:$0xff]
                  %623 = vst [vmem:[%s605 + $0x40] sm:$0xff] %v622
                  %v624 = vld [vmem:[%s604 + $0x48] sm:$0xff]
                  %625 = vst [vmem:[%s605 + $0x48] sm:$0xff] %v624
                  %v626 = vld [vmem:[%s604 + $0x50] sm:$0xff]
                  %627 = vst [vmem:[%s605 + $0x50] sm:$0xff] %v626
                  %v628 = vld [vmem:[%s604 + $0x58] sm:$0xff]
                  %629 = vst [vmem:[%s605 + $0x58] sm:$0xff] %v628
                  %v630 = vld [vmem:[%s604 + $0x60] sm:$0xff]
                  %631 = vst [vmem:[%s605 + $0x60] sm:$0xff] %v630
                  %v632 = vld [vmem:[%s604 + $0x68] sm:$0xff]
                  %633 = vst [vmem:[%s605 + $0x68] sm:$0xff] %v632
                  %v634 = vld [vmem:[%s604 + $0x70] sm:$0xff]
                  %635 = vst [vmem:[%s605 + $0x70] sm:$0xff] %v634
                  %v636 = vld [vmem:[%s604 + $0x78] sm:$0xff]
                  %637 = vst [vmem:[%s605 + $0x78] sm:$0xff] %v636
                  %v638 = vld [vmem:[%s604 + $0x80] sm:$0xff]
                  %639 = vst [vmem:[%s605 + $0x80] sm:$0xff] %v638
                  %v640 = vld [vmem:[%s604 + $0x88] sm:$0xff]
                  %641 = vst [vmem:[%s605 + $0x88] sm:$0xff] %v640
                  %v642 = vld [vmem:[%s604 + $0x90] sm:$0xff]
                  %643 = vst [vmem:[%s605 + $0x90] sm:$0xff] %v642
                  %v644 = vld [vmem:[%s604 + $0x98] sm:$0xff]
                  %645 = vst [vmem:[%s605 + $0x98] sm:$0xff] %v644
                  %v646 = vld [vmem:[%s604 + $0xa0] sm:$0xff]
                  %647 = vst [vmem:[%s605 + $0xa0] sm:$0xff] %v646
                  %v648 = vld [vmem:[%s604 + $0xa8] sm:$0xff]
                  %649 = vst [vmem:[%s605 + $0xa8] sm:$0xff] %v648
                  %v650 = vld [vmem:[%s604 + $0xb0] sm:$0xff]
                  %651 = vst [vmem:[%s605 + $0xb0] sm:$0xff] %v650
                  %v652 = vld [vmem:[%s604 + $0xb8] sm:$0xff]
                  %653 = vst [vmem:[%s605 + $0xb8] sm:$0xff] %v652
                  %v654 = vld [vmem:[%s604 + $0xc0] sm:$0xff]
                  %655 = vst [vmem:[%s605 + $0xc0] sm:$0xff] %v654
                  %v656 = vld [vmem:[%s604 + $0xc8] sm:$0xff]
                  %657 = vst [vmem:[%s605 + $0xc8] sm:$0xff] %v656
                  %v658 = vld [vmem:[%s604 + $0xd0] sm:$0xff]
                  %659 = vst [vmem:[%s605 + $0xd0] sm:$0xff] %v658
                  %v660 = vld [vmem:[%s604 + $0xd8] sm:$0xff]
                  %661 = vst [vmem:[%s605 + $0xd8] sm:$0xff] %v660
                  %v662 = vld [vmem:[%s604 + $0xe0] sm:$0xff]
                  %663 = vst [vmem:[%s605 + $0xe0] sm:$0xff] %v662
                  %v664 = vld [vmem:[%s604 + $0xe8] sm:$0xff]
                  %665 = vst [vmem:[%s605 + $0xe8] sm:$0xff] %v664
                  %v666 = vld [vmem:[%s604 + $0xf0] sm:$0xff]
                  %667 = vst [vmem:[%s605 + $0xf0] sm:$0xff] %v666
                  %v668 = vld [vmem:[%s604 + $0xf8] sm:$0xff]
                  %669 = vst [vmem:[%s605 + $0xf8] sm:$0xff] %v668
                  %v670 = vld [vmem:[%s604 + $0x100] sm:$0xff]
                  %671 = vst [vmem:[%s605 + $0x100] sm:$0xff] %v670
                  %v672 = vld [vmem:[%s604 + $0x108] sm:$0xff]
                  %673 = vst [vmem:[%s605 + $0x108] sm:$0xff] %v672
                  %v674 = vld [vmem:[%s604 + $0x110] sm:$0xff]
                  %675 = vst [vmem:[%s605 + $0x110] sm:$0xff] %v674
                  %v676 = vld [vmem:[%s604 + $0x118] sm:$0xff]
                  %677 = vst [vmem:[%s605 + $0x118] sm:$0xff] %v676
                  %v678 = vld [vmem:[%s604 + $0x120] sm:$0xff]
                  %679 = vst [vmem:[%s605 + $0x120] sm:$0xff] %v678
                  %v680 = vld [vmem:[%s604 + $0x128] sm:$0xff]
                  %681 = vst [vmem:[%s605 + $0x128] sm:$0xff] %v680
                  %v682 = vld [vmem:[%s604 + $0x130] sm:$0xff]
                  %683 = vst [vmem:[%s605 + $0x130] sm:$0xff] %v682
                  %v684 = vld [vmem:[%s604 + $0x138] sm:$0xff]
                  %685 = vst [vmem:[%s605 + $0x138] sm:$0xff] %v684
                  %v686 = vld [vmem:[%s604 + $0x140] sm:$0xff]
                  %687 = vst [vmem:[%s605 + $0x140] sm:$0xff] %v686
                  %v688 = vld [vmem:[%s604 + $0x148] sm:$0xff]
                  %689 = vst [vmem:[%s605 + $0x148] sm:$0xff] %v688
                  %v690 = vld [vmem:[%s604 + $0x150] sm:$0xff]
                  %691 = vst [vmem:[%s605 + $0x150] sm:$0xff] %v690
                  %v692 = vld [vmem:[%s604 + $0x158] sm:$0xff]
                  %693 = vst [vmem:[%s605 + $0x158] sm:$0xff] %v692
                  %v694 = vld [vmem:[%s604 + $0x160] sm:$0xff]
                  %695 = vst [vmem:[%s605 + $0x160] sm:$0xff] %v694
                  %v696 = vld [vmem:[%s604 + $0x168] sm:$0xff]
                  %697 = vst [vmem:[%s605 + $0x168] sm:$0xff] %v696
                  %v698 = vld [vmem:[%s604 + $0x170] sm:$0xff]
                  %699 = vst [vmem:[%s605 + $0x170] sm:$0xff] %v698
                  %v700 = vld [vmem:[%s604 + $0x178] sm:$0xff]
                  %701 = vst [vmem:[%s605 + $0x178] sm:$0xff] %v700
                  %v702 = vld [vmem:[%s604 + $0x180] sm:$0xff]
                  %703 = vst [vmem:[%s605 + $0x180] sm:$0xff] %v702
                  %v704 = vld [vmem:[%s604 + $0x188] sm:$0xff]
                  %705 = vst [vmem:[%s605 + $0x188] sm:$0xff] %v704
                  %v706 = vld [vmem:[%s604 + $0x190] sm:$0xff]
                  %707 = vst [vmem:[%s605 + $0x190] sm:$0xff] %v706
                  %v708 = vld [vmem:[%s604 + $0x198] sm:$0xff]
                  %709 = vst [vmem:[%s605 + $0x198] sm:$0xff] %v708
                  %v710 = vld [vmem:[%s604 + $0x1a0] sm:$0xff]
                  %711 = vst [vmem:[%s605 + $0x1a0] sm:$0xff] %v710
                  %v712 = vld [vmem:[%s604 + $0x1a8] sm:$0xff]
                  %713 = vst [vmem:[%s605 + $0x1a8] sm:$0xff] %v712
                  %v714 = vld [vmem:[%s604 + $0x1b0] sm:$0xff]
                  %715 = vst [vmem:[%s605 + $0x1b0] sm:$0xff] %v714
                  %v716 = vld [vmem:[%s604 + $0x1b8] sm:$0xff]
                  %717 = vst [vmem:[%s605 + $0x1b8] sm:$0xff] %v716
                  %v718 = vld [vmem:[%s604 + $0x1c0] sm:$0xff]
                  %719 = vst [vmem:[%s605 + $0x1c0] sm:$0xff] %v718
                  %v720 = vld [vmem:[%s604 + $0x1c8] sm:$0xff]
                  %721 = vst [vmem:[%s605 + $0x1c8] sm:$0xff] %v720
                  %v722 = vld [vmem:[%s604 + $0x1d0] sm:$0xff]
                  %723 = vst [vmem:[%s605 + $0x1d0] sm:$0xff] %v722
                  %v724 = vld [vmem:[%s604 + $0x1d8] sm:$0xff]
                  %725 = vst [vmem:[%s605 + $0x1d8] sm:$0xff] %v724
                  %v726 = vld [vmem:[%s604 + $0x1e0] sm:$0xff]
                  %727 = vst [vmem:[%s605 + $0x1e0] sm:$0xff] %v726
                  %v728 = vld [vmem:[%s604 + $0x1e8] sm:$0xff]
                  %729 = vst [vmem:[%s605 + $0x1e8] sm:$0xff] %v728
                  %v730 = vld [vmem:[%s604 + $0x1f0] sm:$0xff]
                  %731 = vst [vmem:[%s605 + $0x1f0] sm:$0xff] %v730
                  %v732 = vld [vmem:[%s604 + $0x1f8] sm:$0xff]
                  %733 = vst [vmem:[%s605 + $0x1f8] sm:$0xff] %v732
                  %s734 = sadd.s32 1, %s603
                  %p735 = scmp.ge.s32.totalorder %s734, %s594
                  %s736 = scalar_select %p735, 0, %s734
                  %s737 = smul.u32 %s736, 512
                  %s738 = smul.u32 %s736, 512
                  %s739 = scalar_lea.vmem %s367, %s737 [#allocation2]
                  %s740 = scalar_lea.vmem %s380, %s738
                $region82: #{horizontal_stripe_scale_pallas.1} parent=76 // loop_footer
                  %s600 = sadd.s32 %s598, 1
                $region83: #{horizontal_stripe_scale_pallas.1} parent=76 // loop_footer_branch
                  %597 = sbr.rel target = $region79
                $region84: #{horizontal_stripe_scale_pallas.1} parent=76 // loop_exit
                  _
                %s741 = sshrl.u32 %s593, 6
                %s742 = sand.u32 %s593, 63
                %s743 = smul.u32 %s741, 64
                %s744 = smul.u32 128, %s743
                %s745 = sshra.s32 %s744, 4
                %s746 = scalar_lea.vmem %s367, %s745 [#allocation2]
                %s747 = smul.u32 128, %s743
                %s748 = sshra.s32 %s747, 4
                %s749 = scalar_lea.vmem %s380, %s748
                // While loop
                $region85: #{horizontal_stripe_scale_pallas.1} parent=76 // loop_pre_header
                  _
                $region86: #{horizontal_stripe_scale_pallas.1} parent=76 // loop_header
                  %s753 = sphi 0, %s755
                  %p754 = scmp.ge.s32.totalorder %s753, %s742
                  %s758 = sphi 0, %s765
                  %s759 = sphi %s746, %s768
                  %s760 = sphi %s749, %s769
                $region87: #{horizontal_stripe_scale_pallas.1} parent=76 // loop_header_branch
                  %757 = sbr.rel (%p754) target = $region91
                $region88: #{horizontal_stripe_scale_pallas.1} parent=76 // loop_body
                  %v761 = vld [vmem:[%s759] sm:$0xff]
                  %762 = vst [vmem:[%s760] sm:$0xff] %v761
                  %s763 = sadd.s32 1, %s758
                  %p764 = scmp.ge.s32.totalorder %s763, %s742
                  %s765 = scalar_select %p764, 0, %s763
                  %s766 = smul.u32 %s765, 8
                  %s767 = smul.u32 %s765, 8
                  %s768 = scalar_lea.vmem %s746, %s766 [#allocation2]
                  %s769 = scalar_lea.vmem %s749, %s767
                $region89: #{horizontal_stripe_scale_pallas.1} parent=76 // loop_footer
                  %s755 = sadd.s32 %s753, 1
                $region90: #{horizontal_stripe_scale_pallas.1} parent=76 // loop_footer_branch
                  %752 = sbr.rel target = $region86
                $region91: #{horizontal_stripe_scale_pallas.1} parent=76 // loop_exit
                  _
                %s770 = sshllo.u32 0, %s588
                loop: start=0, step=1, limit=1
                $region92: #{horizontal_stripe_scale_pallas.1} parent=76 // loop_pre_header
                  _
                $region93: #{horizontal_stripe_scale_pallas.1} parent=76 // loop_header
                  %s772 = sphi 0, %s776
                  %p773 = scmp.ge.s32.totalorder %s772, 1
                  %s777 = sphi %s590, %s590
                  %s778 = sphi %s592, %s592
                $region94: #{horizontal_stripe_scale_pallas.1} parent=76 // loop_header_branch
                  %775 = sbr.rel (%p773) target = $region98
                $region95: #{horizontal_stripe_scale_pallas.1} parent=76 // loop_body
                  %v779 = vld [vmem:[%s777] sm:%s770]
                  %780 = vst [vmem:[%s778] sm:%s770] %v779
                $region96: #{horizontal_stripe_scale_pallas.1} parent=76 // loop_footer
                  %s776 = sadd.s32 1, %s772
                $region97: #{horizontal_stripe_scale_pallas.1} parent=76 // loop_footer_branch
                  %771 = sbr.rel target = $region93
                $region98: #{horizontal_stripe_scale_pallas.1} parent=76 // loop_exit
                  _
              $region77: #{horizontal_stripe_scale_pallas.1} parent=43 // pred_fallthru
                _
            $region44: #{horizontal_stripe_scale_pallas.1} parent=39 // pred_fallthru
              _
            // Predicated region
            $region45: #{horizontal_stripe_scale_pallas.1} parent=39 // pred_check
              %p389 = pneg %p385
            $region46: #{horizontal_stripe_scale_pallas.1} parent=39 // pred_check_branch
              %391 = sbr.rel (%p389) target = $region48
            $region47: #{horizontal_stripe_scale_pallas.1} parent=39 // pred_region
              %s392 = sshllo.u32 0, %s381
              loop: start=0, step=1, limit=1
              $region49: #{horizontal_stripe_scale_pallas.1} parent=47 // loop_pre_header
                _
              $region50: #{horizontal_stripe_scale_pallas.1} parent=47 // loop_header
                %s394 = sphi 0, %s398
                %p395 = scmp.ge.s32.totalorder %s394, 1
                %s399 = sphi %s367, %s367
                %s400 = sphi %s380, %s380
              $region51: #{horizontal_stripe_scale_pallas.1} parent=47 // loop_header_branch
                %397 = sbr.rel (%p395) target = $region55
              $region52: #{horizontal_stripe_scale_pallas.1} parent=47 // loop_body
                %v401 = vld [vmem:[%s399] sm:%s392]
                %402 = vst [vmem:[%s400] sm:%s392] %v401
              $region53: #{horizontal_stripe_scale_pallas.1} parent=47 // loop_footer
                %s398 = sadd.s32 1, %s394
              $region54: #{horizontal_stripe_scale_pallas.1} parent=47 // loop_footer_branch
                %393 = sbr.rel target = $region50
              $region55: #{horizontal_stripe_scale_pallas.1} parent=47 // loop_exit
                _
            $region48: #{horizontal_stripe_scale_pallas.1} parent=39 // pred_fallthru
              _
          $region40: #{horizontal_stripe_scale_pallas.1} parent=35 // pred_fallthru
            _
          %781 = vnop
        $region36: #{horizontal_stripe_scale_pallas.1} parent=31 // pred_fallthru
          _
      $region32: #{horizontal_stripe_scale_pallas.1} parent=5 // pred_fallthru
        _
      %p782 = scmp.le.s32.totalorder 2, %s9
      // Predicated region
      $region99: #{horizontal_stripe_scale_pallas.1} parent=5 // pred_check
        %p783 = pneg %p782
      $region100: #{horizontal_stripe_scale_pallas.1} parent=5 // pred_check_branch
        %785 = sbr.rel (%p783) target = $region102
      $region101: #{horizontal_stripe_scale_pallas.1} parent=5 // pred_region
        %s786 = ssub.s32 %s9, 2
        // Predicated region
        $region103: #{horizontal_stripe_scale_pallas.1} parent=101 // pred_check
          %p787 = pneg %p132
        $region104: #{horizontal_stripe_scale_pallas.1} parent=101 // pred_check_branch
          %789 = sbr.rel (%p787) target = $region106
        $region105: #{horizontal_stripe_scale_pallas.1} parent=101 // pred_region
          %s790 = sand.u32 %s117, 1
          %s791 = sand.u32 %s117, 1
          %s792 = smul.addr %s791, 12
          %s793 = scalar_lea.vmem [#allocation2], %s792
        $region106: #{horizontal_stripe_scale_pallas.1} parent=101 // pred_fallthru
          _
      $region102: #{horizontal_stripe_scale_pallas.1} parent=5 // pred_fallthru
        _
    $region6: #{horizontal_stripe_scale_pallas.1} parent=1 // loop_footer
      %s13 = sadd.s32 1, %s9
    $region7: #{horizontal_stripe_scale_pallas.1} parent=1 // loop_footer_branch
      %8 = sbr.rel target = $region3
    $region8: #{horizontal_stripe_scale_pallas.1} parent=1 // loop_exit
      _

</llo_original>
